<compile_context>
chip_gen: v7x
topology: tpu7x:2x2x1
jax: 0.10.0
libtpu: 0.0.40
codegen_flags: <defaults>
</compile_context>

<pallas_src>
import functools
from typing import NamedTuple, Optional

import jax
import jax.numpy as jnp
from jax.experimental import pallas as pl
from jax.experimental.pallas import tpu as pltpu


# --------------------------------------------------------------------------- #
# helpers
# --------------------------------------------------------------------------- #
def _round_up(x: int, m: int) -> int:
    return (x + m - 1) // m * m


def _sublane_multiple(dtype) -> int:
    """Minimum second-minor tile for a dtype (sub-32-bit packs along sublanes)."""
    size = jnp.dtype(dtype).itemsize
    if size >= 4:
        return 8
    if size == 2:
        return 16
    return 32


def _vmem_capacity_bytes() -> int:
    """Per-TensorCore VMEM capacity; conservative (v7x) fallback off-device."""
    try:
        cap = int(getattr(pltpu.get_tpu_info(), "vmem_capacity_bytes", 0))
        if cap > 0:
            return cap
    except Exception:
        pass
    return 64 * 1024 * 1024  # v7x per-TC VMEM (smallest of v5e/v6e/v7x)


# --------------------------------------------------------------------------- #
# kernels
# --------------------------------------------------------------------------- #
def _theta_kernel_single_k(x_ref, wt_ref, b_ref, o_ref):
    """Single-K (weight-resident) path: one MXU pass, no scratch accumulator.

    x_ref:  (tm, Dk)   full-K row strip of features
    wt_ref: (Dk, tn)   full-K tile of W^T (stays resident across the M loop)
    b_ref:  (1, tn)    f32 bias tile
    o_ref:  (tm, tn)   output tile
    """
    acc = jnp.dot(x_ref[...], wt_ref[...], preferred_element_type=jnp.float32)
    o_ref[...] = (acc + b_ref[...].astype(jnp.float32)).astype(o_ref.dtype)


def _theta_kernel_ktiled(x_ref, wt_ref, b_ref, o_ref, acc_ref):
    """K-tiled fallback: f32 accumulator across the (innermost) K grid axis."""
    k = pl.program_id(2)

    @pl.when(k == 0)
    def _init():
        # Fold the bias add into the accumulator init.
        acc_ref[...] = jnp.broadcast_to(
            b_ref[...].astype(jnp.float32), acc_ref.shape)

    acc_ref[...] += jnp.dot(
        x_ref[...], wt_ref[...], preferred_element_type=jnp.float32)

    @pl.when(k == pl.num_programs(2) - 1)
    def _store():
        o_ref[...] = acc_ref[...].astype(o_ref.dtype)


# --------------------------------------------------------------------------- #
# parameter preparation (one-time, hoisted out of the forward hot path)
# --------------------------------------------------------------------------- #
class ThetaParams(NamedTuple):
    wt: jax.Array       # [Dk, Dn]  pre-transposed + padded weight
    bias2d: jax.Array   # [1, Dn]   f32 bias, padded
    dim: int            # original D
    tn: int             # N tile (lane-dense, divides Dn)
    tk: int             # K tile (divides Dk); tk == Dk -> weight-resident path


def prepare_theta_params(weight: jax.Array, bias: jax.Array,
                         compute_dtype=None, *, max_tile: int = 512,
                         force_k_tiles: Optional[int] = None) -> ThetaParams:
    """Pre-transpose / pad the Linear weight once so every forward call skips it.

    weight: [D, D] PyTorch [out, in] layout.  bias: [D].
    compute_dtype: e.g. jnp.bfloat16 to halve the weight stream (f32 accumulate).
    """
    D_out, D_in = weight.shape
    assert D_out == D_in, "Theta uses a square Linear(dim, dim)"
    assert bias.shape == (D_in,)
    D = D_in

    dtype = jnp.dtype(compute_dtype) if compute_dtype is not None \
        else jnp.dtype(weight.dtype)
    itemsize = dtype.itemsize
    d128 = _round_up(D, 128)

    cap = _vmem_capacity_bytes()
    budget = cap // 2            # keep headroom for double-buffering + compiler
    TM_MAX = 256                 # worst-case row tile assumed when budgeting

    # ---- N tile: lane-dense, <= max_tile; split in two when possible so the
    #      "parallel" axes carry >= 2 tiles for v7x's 2 TensorCores.
    tn = min(_round_up(min(max_tile, d128), 128), d128)
    if tn == d128 and d128 >= 256 and (d128 // 2) % 128 == 0:
        tn = d128 // 2

    # ---- K tile: prefer full-K (weight-resident, single K grid step).
    tk = d128
    resident_bytes = (2 * (TM_MAX * tk + tk * tn + 8 * tn)
                      + 2 * TM_MAX * tn) * itemsize
    if force_k_tiles is not None and force_k_tiles > 1:
        tk = max(128, _round_up(d128 // force_k_tiles, 128))
    elif resident_bytes > budget:
        tk = min(_round_up(min(max_tile, d128), 128), d128)

    Dn = _round_up(D, tn)
    Dk = _round_up(D, tk)

    wt = weight.T.astype(dtype)                         # [K=in, N=out]
    if (Dk, Dn) != (D, D):
        wt = jnp.pad(wt, ((0, Dk - D), (0, Dn - D)))
    bias2d = bias.astype(jnp.float32)
    if Dn != D:
        bias2d = jnp.pad(bias2d, (0, Dn - D))
    bias2d = bias2d.reshape(1, Dn)

    return ThetaParams(wt=wt, bias2d=bias2d, dim=D, tn=tn, tk=tk)


# --------------------------------------------------------------------------- #
# forward
# --------------------------------------------------------------------------- #
@functools.partial(jax.jit, static_argnames=("dim", "tm", "tn", "tk"))
def _theta_forward_impl(features, wt, bias2d, *, dim, tm, tn, tk):
    M, Dx = features.shape
    assert Dx == dim
    Dk, Dn = wt.shape
    dtype = wt.dtype                 # compute dtype (operands fed to the MXU)
    out_dtype = features.dtype

    # Row tile rounded to the dtype sublane multiple (8 f32 / 16 bf16 / 32 i8).
    sub = _sublane_multiple(dtype)
    tm_eff = max(sub, min(_round_up(tm, sub), _round_up(M, sub)))
    Mp = _round_up(M, tm_eff)

    x = features.astype(dtype)
    if (Mp, Dk) != (M, dim):
        x = jnp.pad(x, ((0, Mp - M), (0, Dk - dim)))

    n_m = Mp // tm_eff
    n_n = Dn // tn
    n_k = Dk // tk

    itemsize = jnp.dtype(dtype).itemsize
    cap = _vmem_capacity_bytes()

    if n_k == 1:
        # Weight-resident / single-K fast path: no K axis, no accumulator.
        # Grid is (N, M) with M innermost so the W^T tile stays resident
        # across the whole M sweep (no re-DMA of the dominant operand).
        vmem_est = (2 * (tm_eff * Dk + Dk * tn + 8 * tn)
                    + 2 * tm_eff * tn) * itemsize
        grid_spec = pltpu.PrefetchScalarGridSpec(
            num_scalar_prefetch=0,
            grid=(n_n, n_m),
            in_specs=[
                pl.BlockSpec((tm_eff, Dk), lambda j, i: (i, 0)),   # x strip
                pl.BlockSpec((Dk, tn), lambda j, i: (0, j)),       # W^T tile
                pl.BlockSpec((1, tn), lambda j, i: (0, j)),        # bias tile
            ],
            out_specs=pl.BlockSpec((tm_eff, tn), lambda j, i: (i, j)),
        )
        kernel = _theta_kernel_single_k
        dim_semantics = ("parallel", "parallel")
    else:
        # K-tiled fallback (very large D): f32 accumulator, K innermost.
        vmem_est = ((2 * (tm_eff * tk + tk * tn + 8 * tn)
                     + 2 * tm_eff * tn) * itemsize
                    + tm_eff * tn * 4)
        grid_spec = pltpu.PrefetchScalarGridSpec(
            num_scalar_prefetch=0,
            grid=(n_m, n_n, n_k),
            in_specs=[
                pl.BlockSpec((tm_eff, tk), lambda i, j, k: (i, k)),
                pl.BlockSpec((tk, tn), lambda i, j, k: (k, j)),
                pl.BlockSpec((1, tn), lambda i, j, k: (0, j)),
            ],
            out_specs=pl.BlockSpec((tm_eff, tn), lambda i, j, k: (i, j)),
            scratch_shapes=[pltpu.VMEM((tm_eff, tn), jnp.float32)],
        )
        kernel = _theta_kernel_ktiled
        dim_semantics = ("parallel", "parallel", "arbitrary")

    # Generation-aware VMEM limit: never exceed the physical per-core budget
    # (64 MiB on v7x), but leave room for double-buffered tiles.
    vmem_limit = int(min(cap - 8 * 1024 * 1024,
                         max(32 * 1024 * 1024, 2 * vmem_est)))
    vmem_limit = max(vmem_limit, int(vmem_est) + 2 * 1024 * 1024)

    out = pl.pallas_call(
        kernel,
        out_shape=jax.ShapeDtypeStruct((Mp, Dn), out_dtype),
        grid_spec=grid_spec,
        compiler_params=pltpu.CompilerParams(
            dimension_semantics=dim_semantics,
            vmem_limit_bytes=vmem_limit),
    )(x, wt, bias2d)

    if (Mp, Dn) != (M, dim):
        out = out[:M, :dim]
    return out


def theta_forward(features: jax.Array, params: ThetaParams, *,
                  tm: int = 256) -> jax.Array:
    """Forward pass of Theta: grl(identity) -> Linear -> grl(identity)."""
    # TODO(synk): GradientReverseLayer only alters gradients (backward pass);
    # forward is identity, so no Pallas op is needed for it here.
    return _theta_forward_impl(features, params.wt, params.bias2d,
                               dim=params.dim, tm=tm,
                               tn=params.tn, tk=params.tk)


# --------------------------------------------------------------------------- #
# self-test
# --------------------------------------------------------------------------- #
if __name__ == "__main__":
    key = jax.random.PRNGKey(0)
    k_feat, k_w, k_b = jax.random.split(key, 3)

    batch, dim = 8, 32
    features = jax.random.normal(k_feat, (batch, dim), dtype=jnp.float32)

    # 1) Parameters exactly as in Theta.__init__:
    #    nn.init.eye_(layer1.weight); nn.init.zeros_(layer1.bias)  -> identity
    weight_eye = jnp.eye(dim, dtype=jnp.float32)
    bias_zero = jnp.zeros((dim,), dtype=jnp.float32)
    p_eye = prepare_theta_params(weight_eye, bias_zero)
    out = jax.block_until_ready(theta_forward(features, p_eye))
    ref = features @ weight_eye.T + bias_zero
    assert out.shape == (batch, dim)
    assert jnp.allclose(out, ref, atol=1e-5, rtol=1e-5), "mismatch (identity init)"

    # 2) Random Linear params, f32, weight-resident single-K path.
    weight_rnd = jax.random.normal(k_w, (dim, dim), dtype=jnp.float32)
    bias_rnd = jax.random.normal(k_b, (dim,), dtype=jnp.float32)
    p_rnd = prepare_theta_params(weight_rnd, bias_rnd)
    out2 = jax.block_until_ready(theta_forward(features, p_rnd))
    ref2 = features @ weight_rnd.T + bias_rnd
    assert jnp.allclose(out2, ref2, atol=1e-4, rtol=1e-4), "mismatch (random f32)"

    # 3) bf16 operand path (f32 accumulate) — compare against a bf16-cast ref.
    p_bf16 = prepare_theta_params(weight_rnd, bias_rnd,
                                  compute_dtype=jnp.bfloat16)
    out3 = jax.block_until_ready(theta_forward(features, p_bf16))
    xb = features.astype(jnp.bfloat16).astype(jnp.float32)
    wb = weight_rnd.astype(jnp.bfloat16).astype(jnp.float32)
    ref3 = xb @ wb.T + bias_rnd
    assert out3.dtype == features.dtype
    assert jnp.allclose(out3, ref3, atol=1e-2, rtol=1e-2), "mismatch (bf16 path)"

    # 4) Force the K-tiled accumulator fallback (still tiny shapes).
    dim2, batch2 = 256, 16
    f2 = jax.random.normal(k_feat, (batch2, dim2), dtype=jnp.float32)
    w2 = jax.random.normal(k_w, (dim2, dim2), dtype=jnp.float32)
    b2 = jax.random.normal(k_b, (dim2,), dtype=jnp.float32)
    p_kt = prepare_theta_params(w2, b2, force_k_tiles=2)
    assert p_kt.tk < _round_up(dim2, 128)  # K really is tiled
    out4 = jax.block_until_ready(theta_forward(f2, p_kt))
    ref4 = f2 @ w2.T + b2
    assert jnp.allclose(out4, ref4, atol=1e-3, rtol=1e-3), "mismatch (K-tiled)"

    print("KERNEL_OK")
</pallas_src>

<mosaic_0001>
module attributes {stable_mosaic.version = 11 : i64} {
  func.func @_theta_kernel_single_k(%arg0: i32, %arg1: i32, %arg2: memref<8x128xf32, #tpu.memory_space<vmem>>, %arg3: memref<128x128xf32, #tpu.memory_space<vmem>>, %arg4: memref<1x128xf32, #tpu.memory_space<vmem>>, %arg5: memref<8x128xf32, #tpu.memory_space<vmem>>) attributes {dimension_semantics = [#tpu.dimension_semantics<parallel>, #tpu.dimension_semantics<parallel>], iteration_bounds = array<i64: 1, 1>, scalar_prefetch = 0 : i64, scratch_operands = 0 : i64, tpu.core_type = #tpu.core_type<tc>, window_params = [{transform_indices = @transform_0, window_bounds = array<i64: 8, 128>}, {transform_indices = @transform_1, window_bounds = array<i64: 128, 128>}, {transform_indices = @transform_2, window_bounds = array<i64: 1, 128>}, {transform_indices = @transform_3, window_bounds = array<i64: 8, 128>}]} {
    %c0 = arith.constant 0 : index
    %c0_0 = arith.constant 0 : index
    %0 = vector.load %arg2[%c0, %c0_0] : memref<8x128xf32, #tpu.memory_space<vmem>>, vector<8x128xf32>
    %c0_1 = arith.constant 0 : index
    %c0_2 = arith.constant 0 : index
    %1 = vector.load %arg3[%c0_1, %c0_2] : memref<128x128xf32, #tpu.memory_space<vmem>>, vector<128x128xf32>
    %cst = arith.constant dense<0.000000e+00> : vector<8x128xf32>
    %2 = tpu.matmul %0, %1, %cst {dimension_numbers = #tpu.dot_dimension_numbers<[1], [0], [0], [1], [0, 0, 1, 1], [], []>} : vector<8x128xf32>, vector<128x128xf32>, vector<8x128xf32> -> vector<8x128xf32>
    %c0_3 = arith.constant 0 : index
    %c0_4 = arith.constant 0 : index
    %3 = vector.load %arg4[%c0_3, %c0_4] : memref<1x128xf32, #tpu.memory_space<vmem>>, vector<1x128xf32>
    %4 = vector.broadcast %3 : vector<1x128xf32> to vector<8x128xf32>
    %5 = arith.addf %2, %4 : vector<8x128xf32>
    %c0_5 = arith.constant 0 : index
    %c0_6 = arith.constant 0 : index
    %6 = vector.load %arg5[%c0_5, %c0_6] : memref<8x128xf32, #tpu.memory_space<vmem>>, vector<8x128xf32>
    tpu.vector_store %arg5[%c0_5, %c0_6], %5 {strides = array<i32>} : memref<8x128xf32, #tpu.memory_space<vmem>>, vector<8x128xf32>,
    return
  }
  func.func @transform_0(%arg0: i32, %arg1: i32) -> (i32, i32) {
    %c0_i32 = arith.constant 0 : i32
    %c0_i32_0 = arith.constant 0 : i32
    return %arg1, %c0_i32 : i32, i32
  }
  func.func @transform_1(%arg0: i32, %arg1: i32) -> (i32, i32) {
    %c0_i32 = arith.constant 0 : i32
    %c0_i32_0 = arith.constant 0 : i32
    return %c0_i32, %arg0 : i32, i32
  }
  func.func @transform_2(%arg0: i32, %arg1: i32) -> (i32, i32) {
    %c0_i32 = arith.constant 0 : i32
    %c0_i32_0 = arith.constant 0 : i32
    return %c0_i32, %arg0 : i32, i32
  }
  func.func @transform_3(%arg0: i32, %arg1: i32) -> (i32, i32) {
    %c0_i32 = arith.constant 0 : i32
    return %arg1, %arg0 : i32, i32
  }
}

</mosaic_0001>

<llo_original>
// kernel: _theta_forward_impl.1
$region0: #{_theta_forward_impl.1}
  #allocation0 [shape = 'u32[]', space=smem, size = 0x4, offset = 0x4, fixed_abs, tag = 'smem constant byte address 0x4 - core index']
  #allocation1 [shape = 'u32[144,128]{1,0:T(1,128)}', space=vmem, size = 0x12000, scoped, tag = 'internal scratch']
  %s0 = inlined_call_operand.vmem [shape: f32[8,128], index: 0, kind: input, shape index: {}]
  %s1 = inlined_call_operand.hbm [shape: f32[128,128], index: 1, kind: input, shape index: {}]
  %s2 = inlined_call_operand.vmem [shape: f32[1,128], index: 2, kind: input, shape index: {}]
  %s3 = inlined_call_operand.hbm [shape: f32[8,128], index: 3, kind: output, shape index: {}]
  %s4 = sld [smem:[#allocation0]]
  $region26: #{_theta_forward_impl.1} parent=0
    _
  %s6 = ssub.s32 1, %s4
  %s7 = scalar_select 0, %s6, %s4
  $region1: #{_theta_forward_impl.1} parent=0
    #allocation2 [shape = 'u8[65536]{0}', space=vmem, size = 0x10000, scoped, tag = 'input window, operand 1, single buffered']
    #allocation3 [shape = 's32[1]{0}', space=sflag, size = 0x4, scoped, tag = 'scoped memory for _theta_forward_impl.1']
    #allocation4 [shape = 's32[1]{0}', space=sflag, size = 0x4, scoped, tag = 'scoped memory for _theta_forward_impl.1']
    #allocation5 [shape = 'u8[4096]{0}', space=vmem, size = 0x1000, scoped, tag = 'output window, operand 0, single buffered']
    %8 = vsyncpa [#allocation3], 0
    %9 = vsyncpa [#allocation4], 0
    // Predicated region
    $region2: #{_theta_forward_impl.1} parent=1 // pred_check
      _
    $region3: #{_theta_forward_impl.1} parent=1 // pred_check_branch
      %11 = sbr.rel (0) target = $region5
    $region4: #{_theta_forward_impl.1} parent=1 // pred_region
      _
    $region5: #{_theta_forward_impl.1} parent=1 // pred_fallthru
      _
    // Predicated region
    $region6: #{_theta_forward_impl.1} parent=1 // pred_check
      _
    $region7: #{_theta_forward_impl.1} parent=1 // pred_check_branch
      %13 = sbr.rel (0) target = $region9
    $region8: #{_theta_forward_impl.1} parent=1 // pred_region
      %s15 = ssub.s32 2048, 2048
      %16 = vsyncadd [#allocation3], %s15
      %s17 = sshll.u32 [#allocation2], 4
      %s18 = int_to_ptr.vmem [resolvable:$true] %s17
      %23 = dma.hbm_to_vmem [thread:$0]  %s1, 2048, %s18, [#allocation3], 128, 128, 8
    $region9: #{_theta_forward_impl.1} parent=1 // pred_fallthru
      _
    // Predicated region
    $region10: #{_theta_forward_impl.1} parent=1 // pred_check
      _
    $region11: #{_theta_forward_impl.1} parent=1 // pred_check_branch
      %25 = sbr.rel (0) target = $region13
    $region12: #{_theta_forward_impl.1} parent=1 // pred_region
      _
    $region13: #{_theta_forward_impl.1} parent=1 // pred_fallthru
      _
    // Predicated region
    $region14: #{_theta_forward_impl.1} parent=1 // pred_check
      _
    $region15: #{_theta_forward_impl.1} parent=1 // pred_check_branch
      %27 = sbr.rel (0) target = $region17
    $region16: #{_theta_forward_impl.1} parent=1 // pred_region
      %28 = dma.done [#allocation3], 2048
    $region17: #{_theta_forward_impl.1} parent=1 // pred_fallthru
      _
    %v29 = vld [vmem:[%s0] sm:$0xff]
    %v30 = vld [vmem:[#allocation2] sm:$0xff]
    %v31 = vld [vmem:[#allocation2 + $0x8] sm:$0xff]
    %v32 = vld [vmem:[#allocation2 + $0x10] sm:$0xff]
    %v33 = vld [vmem:[#allocation2 + $0x18] sm:$0xff]
    %v34 = vld [vmem:[#allocation2 + $0x20] sm:$0xff]
    %v35 = vld [vmem:[#allocation2 + $0x28] sm:$0xff]
    %v36 = vld [vmem:[#allocation2 + $0x30] sm:$0xff]
    %v37 = vld [vmem:[#allocation2 + $0x38] sm:$0xff]
    %v38 = vld [vmem:[#allocation2 + $0x40] sm:$0xff]
    %v39 = vld [vmem:[#allocation2 + $0x48] sm:$0xff]
    %v40 = vld [vmem:[#allocation2 + $0x50] sm:$0xff]
    %v41 = vld [vmem:[#allocation2 + $0x58] sm:$0xff]
    %v42 = vld [vmem:[#allocation2 + $0x60] sm:$0xff]
    %v43 = vld [vmem:[#allocation2 + $0x68] sm:$0xff]
    %v44 = vld [vmem:[#allocation2 + $0x70] sm:$0xff]
    %v45 = vld [vmem:[#allocation2 + $0x78] sm:$0xff]
    %v46 = vld [vmem:[%s2] sm:$0x1]
    %v48 = vlaneseq
    %v49 = vshrl.u32 %v48, 7
    %v50 = vsub.s32 0, %v49
    %v51 = vrot.slane %v46, %v50
    %53 = vmatprep.subr.mxu0 0.0
    %54 = vmatpush1.msra.mxu0 %v30
    %55 = vmatprep.subr.mxu0 0.0
    %56 = vmatpush1.msra.mxu0 %v31
    %57 = vmatprep.subr.mxu0 0.0
    %58 = vmatpush1.msra.mxu0 %v32
    %59 = vmatprep.subr.mxu0 0.0
    %60 = vmatpush1.msra.mxu0 %v33
    %61 = vmatprep.subr.mxu0 0.0
    %62 = vmatpush1.msra.mxu0 %v34
    %63 = vmatprep.subr.mxu0 0.0
    %64 = vmatpush1.msra.mxu0 %v35
    %65 = vmatprep.subr.mxu0 0.0
    %66 = vmatpush1.msra.mxu0 %v36
    %67 = vmatprep.subr.mxu0 0.0
    %68 = vmatpush1.msra.mxu0 %v37
    %69 = vmatprep.subr.mxu0 0.0
    %70 = vmatpush1.msra.mxu0 %v38
    %71 = vmatprep.subr.mxu0 0.0
    %72 = vmatpush1.msra.mxu0 %v39
    %73 = vmatprep.subr.mxu0 0.0
    %74 = vmatpush1.msra.mxu0 %v40
    %75 = vmatprep.subr.mxu0 0.0
    %76 = vmatpush1.msra.mxu0 %v41
    %77 = vmatprep.subr.mxu0 0.0
    %78 = vmatpush1.msra.mxu0 %v42
    %79 = vmatprep.subr.mxu0 0.0
    %80 = vmatpush1.msra.mxu0 %v43
    %81 = vmatprep.subr.mxu0 0.0
    %82 = vmatpush1.msra.mxu0 %v44
    %83 = vmatprep.subr.mxu0 0.0
    %84 = vmatpush1.msra.mxu0 %v45
    %85 = vmatprep.subr.mxu0 0.0
    %86 = vmatpush1.msra.mxu0 0.0
    %87 = vmatprep.subr.mxu0 0.0
    %88 = vmatpush1.msra.mxu0 0.0
    %89 = vmatprep.subr.mxu0 0.0
    %90 = vmatpush1.msra.mxu0 0.0
    %91 = vmatprep.subr.mxu0 0.0
    %92 = vmatpush1.msra.mxu0 0.0
    %93 = vmatprep.subr.mxu0 0.0
    %94 = vmatpush1.msra.mxu0 0.0
    %95 = vmatprep.subr.mxu0 0.0
    %96 = vmatpush1.msra.mxu0 0.0
    %97 = vmatprep.subr.mxu0 0.0
    %98 = vmatpush1.msra.mxu0 0.0
    %99 = vmatprep.subr.mxu0 0.0
    %100 = vmatpush1.msra.mxu0 0.0
    %101 = vmatprep.subr.mxu0 0.0
    %102 = vmatpush1.msra.mxu0 0.0
    %103 = vmatprep.subr.mxu0 0.0
    %104 = vmatpush1.msra.mxu0 0.0
    %105 = vmatprep.subr.mxu0 0.0
    %106 = vmatpush1.msra.mxu0 0.0
    %107 = vmatprep.subr.mxu0 0.0
    %108 = vmatpush1.msra.mxu0 0.0
    %109 = vmatprep.subr.mxu0 0.0
    %110 = vmatpush1.msra.mxu0 0.0
    %111 = vmatprep.subr.mxu0 0.0
    %112 = vmatpush1.msra.mxu0 0.0
    %113 = vmatprep.subr.mxu0 0.0
    %114 = vmatpush1.msra.mxu0 0.0
    %115 = vmatprep.subr.mxu0 0.0
    %116 = vmatpush1.msra.mxu0 0.0
    %117 = vmatprep.mubr.f32.mxu0 0.0
    %118 = vmatmul.mubr.f32.gmra.mrb[0].mxu0 %v29
    %v119 = vpop.f32.mrb[0].mxu0
    %v120 = vadd.f32 %v51, %v119
    %v121 = vpop.f32.mrb[0].mxu0
    %122 = vdwg.mxu0
    %123 = vst [vmem:[#allocation5] sm:$0xff] %v120
    // Predicated region
    $region18: #{_theta_forward_impl.1} parent=1 // pred_check
      _
    $region19: #{_theta_forward_impl.1} parent=1 // pred_check_branch
      %125 = sbr.rel (0) target = $region21
    $region20: #{_theta_forward_impl.1} parent=1 // pred_region
      %s127 = ssub.s32 128, 128
      %128 = vsyncadd [#allocation4], %s127
      %s130 = sshll.u32 [#allocation5], 4
      %s131 = int_to_ptr.vmem [resolvable:$true] %s130
      %133 = dma.vmem_to_hbm [thread:$0]  %s131, 128, %s3, [#allocation4]
    $region21: #{_theta_forward_impl.1} parent=1 // pred_fallthru
      _
    // Predicated region
    $region22: #{_theta_forward_impl.1} parent=1 // pred_check
      _
    $region23: #{_theta_forward_impl.1} parent=1 // pred_check_branch
      %135 = sbr.rel (0) target = $region25
    $region24: #{_theta_forward_impl.1} parent=1 // pred_region
      %136 = dma.done [#allocation4], 128
    $region25: #{_theta_forward_impl.1} parent=1 // pred_fallthru
      _
    %137 = vsyncpa [#allocation3], 1
    %138 = vsyncpa [#allocation4], 1

</llo_original>
